<compile_context>
chip_gen: v7x
topology: tpu7x:2x2x1
jax: 0.10.0
libtpu: 0.0.40
codegen_flags: <defaults>
</compile_context>

<pallas_src>
import jax
import jax.numpy as jnp
from jax.experimental import pallas as pl
from jax.experimental.pallas import tpu as pltpu

_LANE = 128


def _affine_kernel(x_ref, o_ref):
    # (x + 2) * 3 - 5/2 folded to 3*x + 3.5 (2 VALU ops per vreg; differs from
    # the un-folded form by at most 1 ulp, well inside the 1e-5 tolerance).
    o_ref[...] = x_ref[...] * 3.0 + 3.5


def _tpu_generation_params():
    """(target block bytes, scoped-VMEM limit) per TPU generation.

    v7x: 64 MiB VMEM per TC -> ~6 MiB blocks, 48 MiB scoped limit.
    v5e/v6e: 128 MiB VMEM  -> ~8 MiB blocks, 64 MiB scoped limit.
    Double-buffered in+out footprint = 4 * block_bytes, which stays within the
    chosen limit on every generation.
    """
    try:
        kind = jax.devices()[0].device_kind.lower()
    except Exception:  # no TPU visible at import time -> conservative default
        kind = ""
    if "v7" in kind or "7x" in kind:
        return 6 * 1024 * 1024, 48 << 20
    return 8 * 1024 * 1024, 64 << 20


_TARGET_BYTES, _VMEM_LIMIT = _tpu_generation_params()


def _choose_block_rows(rows: int, itemsize: int, target_bytes: int,
                       min_steps: int = 4) -> int:
    """Pick a lane-dense block height.

    - rows multiple of 32 (bf16/int8 packed-sublane safe) unless the whole
      array is a single full-extent block,
    - block bytes close to `target_bytes` to amortize the ~0.35 us/step grid
      overhead (matters most on v7x at 3.2 TB/s),
    - for large tensors, cap the block so the grid has >= `min_steps` steps so
      the 'parallel' row axis can shard across both v7x TensorCores.
    """
    if rows < 32 * min_steps:
        return rows  # tiny tensor: one full-extent block, overhead is moot
    target_rows = max(32, (target_bytes // (_LANE * itemsize)) // 32 * 32)
    cap = max(32, (rows // min_steps) // 32 * 32)  # guarantees >= min_steps steps
    return min(target_rows, cap)


def _forward_impl(x):
    orig_shape = x.shape
    # PyTorch promotes integer/bool inputs to float because of the `- 5/2`.
    if not jnp.issubdtype(x.dtype, jnp.floating):
        x = x.astype(jnp.float32)
    compute_dtype = x.dtype

    flat = x.reshape(-1)                  # metadata-only under jit
    n = flat.shape[0]
    rows = n // _LANE
    n_aligned = rows * _LANE

    if rows == 0:
        # Fewer than 128 elements: not worth a kernel launch.
        return (flat * 3.0 + 3.5).astype(compute_dtype).reshape(orig_shape)

    slab = flat[:n_aligned].reshape(rows, _LANE)
    itemsize = jnp.dtype(compute_dtype).itemsize
    block_rows = _choose_block_rows(rows, itemsize, _TARGET_BYTES)
    grid = (pl.cdiv(rows, block_rows),)   # ragged row tail masked by Pallas

    out_slab = pl.pallas_call(
        _affine_kernel,
        out_shape=jax.ShapeDtypeStruct((rows, _LANE), compute_dtype),
        grid_spec=pltpu.PrefetchScalarGridSpec(
            num_scalar_prefetch=0,
            grid=grid,
            in_specs=[pl.BlockSpec((block_rows, _LANE), lambda i: (i, 0))],
            out_specs=pl.BlockSpec((block_rows, _LANE), lambda i: (i, 0)),
        ),
        compiler_params=pltpu.CompilerParams(
            # 'parallel' lets the row axis shard across both TensorCores on
            # v7x (grid has >= 4 steps for large tensors).
            # TODO(synk): if a v7x profile shows a single TC streaming, switch
            # this axis to pltpu.CORE_PARALLEL.
            dimension_semantics=("parallel",),
            vmem_limit_bytes=_VMEM_LIMIT,
        ),
        cost_estimate=pl.CostEstimate(
            flops=2 * n_aligned,
            transcendentals=0,
            bytes_accessed=2 * n_aligned * itemsize,
        ),
    )(slab)

    out_flat = out_slab.reshape(-1)
    if n_aligned != n:
        # Rare ragged tail (<128 elems): plain JAX on just the tail instead of
        # padding/slicing the whole tensor (avoids extra full HBM passes).
        tail = (flat[n_aligned:] * 3.0 + 3.5).astype(compute_dtype)
        out_flat = jnp.concatenate([out_flat, tail])
    return out_flat.reshape(orig_shape)


# jit the wrapper so all reshapes are free bitcasts and the pallas_call is the
# only HBM traffic.
pt_module_forward = jax.jit(_forward_impl)


if __name__ == "__main__":
    key = jax.random.PRNGKey(0)
    x = jax.random.normal(key, (2, 4, 16, 16), dtype=jnp.float32)  # NCHW

    y = pt_module_forward(x)
    jax.block_until_ready(y)

    # Reference check (plain JAX, original un-folded form).
    y_ref = (x + 2.0) * 3.0 - 2.5
    assert y.shape == x.shape
    assert y.dtype == x.dtype
    assert jnp.allclose(y, y_ref, atol=1e-5, rtol=1e-5)

    print("KERNEL_OK")
</pallas_src>

<mosaic_0001>
module attributes {stable_mosaic.version = 11 : i64} {
  func.func @_affine_kernel(%arg0: i32, %arg1: memref<16x128xf32, #tpu.memory_space<vmem>>, %arg2: memref<16x128xf32, #tpu.memory_space<vmem>>) attributes {dimension_semantics = [#tpu.dimension_semantics<parallel>], iteration_bounds = array<i64: 1>, scalar_prefetch = 0 : i64, scratch_operands = 0 : i64, tpu.core_type = #tpu.core_type<tc>, window_params = [{transform_indices = @transform_0, window_bounds = array<i64: 16, 128>}, {transform_indices = @transform_1, window_bounds = array<i64: 16, 128>}]} {
    %c0 = arith.constant 0 : index
    %c0_0 = arith.constant 0 : index
    %0 = vector.load %arg1[%c0, %c0_0] : memref<16x128xf32, #tpu.memory_space<vmem>>, vector<16x128xf32>
    %cst = arith.constant 3.000000e+00 : f32
    %1 = vector.broadcast %cst : f32 to vector<16x128xf32>
    %2 = arith.mulf %0, %1 : vector<16x128xf32>
    %cst_1 = arith.constant 3.500000e+00 : f32
    %3 = vector.broadcast %cst_1 : f32 to vector<16x128xf32>
    %4 = arith.addf %2, %3 : vector<16x128xf32>
    %c0_2 = arith.constant 0 : index
    %c0_3 = arith.constant 0 : index
    %5 = vector.load %arg2[%c0_2, %c0_3] : memref<16x128xf32, #tpu.memory_space<vmem>>, vector<16x128xf32>
    tpu.vector_store %arg2[%c0_2, %c0_3], %4 {strides = array<i32>} : memref<16x128xf32, #tpu.memory_space<vmem>>, vector<16x128xf32>,
    return
  }
  func.func @transform_0(%arg0: i32) -> (i32, i32) {
    %c0_i32 = arith.constant 0 : i32
    %c0_i32_0 = arith.constant 0 : i32
    return %arg0, %c0_i32 : i32, i32
  }
  func.func @transform_1(%arg0: i32) -> (i32, i32) {
    %c0_i32 = arith.constant 0 : i32
    %c0_i32_0 = arith.constant 0 : i32
    return %arg0, %c0_i32 : i32, i32
  }
}

</mosaic_0001>

<llo_original>
// kernel: _forward_impl.1
$region0: #{_forward_impl.1}
  #allocation0 [shape = 'u32[]', space=smem, size = 0x4, offset = 0x4, fixed_abs, tag = 'smem constant byte address 0x4 - core index']
  #allocation1 [shape = 'u32[144,128]{1,0:T(1,128)}', space=vmem, size = 0x12000, scoped, tag = 'internal scratch']
  %s0 = inlined_call_operand.hbm [shape: f32[16,128], index: 0, kind: input, shape index: {}]
  %s1 = inlined_call_operand.hbm [shape: f32[16,128], index: 1, kind: output, shape index: {}]
  %s2 = sld [smem:[#allocation0]]
  $region18: #{_forward_impl.1} parent=0
    _
  %s4 = ssub.s32 1, %s2
  %s5 = scalar_select 0, %s4, %s2
  $region1: #{_forward_impl.1} parent=0
    #allocation2 [shape = 'u8[8192]{0}', space=vmem, size = 0x2000, scoped, tag = 'input window, operand 0, single buffered']
    #allocation3 [shape = 's32[1]{0}', space=sflag, size = 0x4, scoped, tag = 'scoped memory for _forward_impl.1']
    #allocation4 [shape = 's32[1]{0}', space=sflag, size = 0x4, scoped, tag = 'scoped memory for _forward_impl.1']
    #allocation5 [shape = 'u8[8192]{0}', space=vmem, size = 0x2000, scoped, tag = 'output window, operand 0, single buffered']
    %6 = vsyncpa [#allocation3], 0
    %7 = vsyncpa [#allocation4], 0
    // Predicated region
    $region2: #{_forward_impl.1} parent=1 // pred_check
      _
    $region3: #{_forward_impl.1} parent=1 // pred_check_branch
      %9 = sbr.rel (0) target = $region5
    $region4: #{_forward_impl.1} parent=1 // pred_region
      %s11 = ssub.s32 256, 256
      %12 = vsyncadd [#allocation3], %s11
      %s13 = sshll.u32 [#allocation2], 4
      %s14 = int_to_ptr.vmem [resolvable:$true] %s13
      %19 = dma.hbm_to_vmem [thread:$0]  %s0, 256, %s14, [#allocation3], 128, 128, 8
    $region5: #{_forward_impl.1} parent=1 // pred_fallthru
      _
    // Predicated region
    $region6: #{_forward_impl.1} parent=1 // pred_check
      _
    $region7: #{_forward_impl.1} parent=1 // pred_check_branch
      %21 = sbr.rel (0) target = $region9
    $region8: #{_forward_impl.1} parent=1 // pred_region
      %22 = dma.done [#allocation3], 256
    $region9: #{_forward_impl.1} parent=1 // pred_fallthru
      _
    %v23 = vld [vmem:[#allocation2] sm:$0xff]
    %v24 = vld [vmem:[#allocation2 + $0x8] sm:$0xff]
    %v25 = vmul.f32 %v23, 3.0
    %v26 = vmul.f32 %v24, 3.0
    %v27 = vadd.f32 %v25, 3.5
    %v28 = vadd.f32 %v26, 3.5
    %29 = vst [vmem:[#allocation5] sm:$0xff] %v27
    %30 = vst [vmem:[#allocation5 + $0x8] sm:$0xff] %v28
    // Predicated region
    $region10: #{_forward_impl.1} parent=1 // pred_check
      _
    $region11: #{_forward_impl.1} parent=1 // pred_check_branch
      %32 = sbr.rel (0) target = $region13
    $region12: #{_forward_impl.1} parent=1 // pred_region
      %s34 = ssub.s32 256, 256
      %35 = vsyncadd [#allocation4], %s34
      %s36 = sshll.u32 [#allocation5], 4
      %s37 = int_to_ptr.vmem [resolvable:$true] %s36
      %42 = dma.vmem_to_hbm [thread:$0]  %s37, 256, %s1, [#allocation4], 128, 128, 8
    $region13: #{_forward_impl.1} parent=1 // pred_fallthru
      _
    // Predicated region
    $region14: #{_forward_impl.1} parent=1 // pred_check
      _
    $region15: #{_forward_impl.1} parent=1 // pred_check_branch
      %44 = sbr.rel (0) target = $region17
    $region16: #{_forward_impl.1} parent=1 // pred_region
      %45 = dma.done [#allocation4], 256
    $region17: #{_forward_impl.1} parent=1 // pred_fallthru
      _
    %46 = vsyncpa [#allocation3], 1
    %47 = vsyncpa [#allocation4], 1

</llo_original>
